<compile_context>
chip_gen: v6e
topology: v6e:2x2x1
jax: 0.10.0
libtpu: 0.0.40
codegen_flags: <defaults>
</compile_context>

<pallas_src>
import functools

import jax
import jax.numpy as jnp
from jax.experimental import pallas as pl
from jax.experimental.pallas import tpu as pltpu


def _round_up(v, m):
    return ((v + m - 1) // m) * m


# ----------------------------- Pallas kernels -------------------------------

def _qdq_sym_kernel(x_ref, scale_ref, o_ref, *, maxq):
    scale = scale_ref[...].astype(jnp.float32)       # (tm, 1)
    inv = 1.0 / scale                                # exact per-row reciprocal
    x = x_ref[...].astype(jnp.float32)               # (tm, tn), upcast in-vreg
    q = jnp.clip(jnp.round(x * inv), -(maxq + 1.0), maxq)
    o_ref[...] = (scale * q).astype(o_ref.dtype)


def _qdq_asym_kernel(x_ref, scale_ref, zero_ref, o_ref, *, maxq):
    scale = scale_ref[...].astype(jnp.float32)       # (tm, 1)
    zero = zero_ref[...].astype(jnp.float32)         # (tm, 1)
    inv = 1.0 / scale
    x = x_ref[...].astype(jnp.float32)
    q = jnp.clip(jnp.round(x * inv) + zero, 0.0, maxq)
    o_ref[...] = (scale * (q - zero)).astype(o_ref.dtype)


def quant_dequant_pallas(x, scale, zero, maxq, sym, *, tm=512, tn=2048):
    """Fake quant-dequant of a 2-D weight.

    x:     (M, N) float (kept in native dtype for HBM traffic)
    scale: (M, 1) float32 per-row scale
    zero:  (M, 1) float32 per-row zero point (ignored when sym=True)
    """
    M, N = x.shape
    # Clamp the tile to the (8,128)-rounded array extent; keeps blocks
    # (8,128)-aligned (lane-dense, unmasked interior stores). Ragged edge
    # blocks are padded/masked by Pallas, so no divisibility assert needed.
    tm = min(tm, _round_up(M, 8))
    tn = min(tn, _round_up(N, 128))
    gm = pl.cdiv(M, tm)
    gn = pl.cdiv(N, tn)

    itemsize = jnp.dtype(x.dtype).itemsize
    # x-in + out, double-buffered, plus tiny scale/zero blocks and slack.
    vmem_needed = 2 * 2 * tm * tn * itemsize + 4 * 2 * 2 * tm * 4 + (1 << 20)
    # Floor at 32 MiB (above every generation's scoped default), cap at
    # 48 MiB so it also fits v7x's 64 MiB physical VMEM.
    vmem_limit = int(min(max(vmem_needed * 2, 32 << 20), 48 << 20))

    x_spec = pl.BlockSpec((tm, tn), lambda i, j: (i, j))
    # scale/zero block index only depends on the row block -> re-fetched only
    # when i changes (the inner column loop re-uses the same tiny block).
    s_spec = pl.BlockSpec((tm, 1), lambda i, j: (i, 0))
    o_spec = pl.BlockSpec((tm, tn), lambda i, j: (i, j))

    if sym:
        kernel = functools.partial(_qdq_sym_kernel, maxq=float(maxq))
        in_specs = [x_spec, s_spec]
        args = (x, scale)                             # zero not DMA'd at all
    else:
        kernel = functools.partial(_qdq_asym_kernel, maxq=float(maxq))
        in_specs = [x_spec, s_spec, s_spec]
        args = (x, scale, zero)

    return pl.pallas_call(
        kernel,
        out_shape=jax.ShapeDtypeStruct((M, N), x.dtype),
        grid_spec=pltpu.PrefetchScalarGridSpec(
            num_scalar_prefetch=0,
            grid=(gm, gn),
            in_specs=in_specs,
            out_specs=o_spec,
        ),
        compiler_params=pltpu.CompilerParams(
            dimension_semantics=("parallel", "parallel"),
            vmem_limit_bytes=vmem_limit,
        ),
    )(*args)


# --------------------------- Module equivalent ------------------------------

class WeightQuantizer:
    """JAX/Pallas port of the PyTorch WeightQuantizer (forward = quantize)."""

    def __init__(self, shape=1):
        self.maxq = 0
        self.scale = jnp.zeros((shape,), jnp.float32)
        self.zero = jnp.zeros((shape,), jnp.float32)
        self.enable = True
        self.bits = 16
        self.perchannel = False
        self.sym = True
        self._params_found = False   # readiness flag: avoids host sync in ready()

    def configure(self, bits, perchannel=False, sym=True, mse=False,
                  norm=2.4, grid=100, maxshrink=0.8):
        self.bits = bits
        self.perchannel = perchannel
        self.sym = sym
        self.mse = mse
        self.norm = norm
        self.grid = grid
        self.maxshrink = maxshrink
        # TODO(synk): MSE grid-search branch of find_params not ported (mse=False path only).
        if sym:
            self.maxq = 2 ** (bits - 1) - 1
        else:
            self.maxq = 2 ** bits - 1

    def find_params(self, x):
        # Plain-JAX parameter setup (min/max reductions), mirrors PyTorch buffers.
        # TODO(synk): could be fused into the quant kernel to save one HBM read of x.
        if self.bits == 16 or not self.enable:
            return
        shape = x.shape
        xf = x.reshape(shape[0], -1) if self.perchannel else x.reshape(1, -1)
        xf = xf.astype(jnp.float32)
        zeros = jnp.zeros((xf.shape[0],), jnp.float32)
        xmin = jnp.minimum(xf.min(axis=1), zeros)
        xmax = jnp.maximum(xf.max(axis=1), zeros)
        if self.sym:
            xmax = jnp.clip(jnp.maximum(jnp.abs(xmin), xmax), min=1e-5)
            scale = xmax / self.maxq
            zero = jnp.zeros_like(scale)
        else:
            both_zero = (xmin == 0) & (xmax == 0)
            xmin = jnp.where(both_zero, -1.0, xmin)
            xmax = jnp.where(both_zero, +1.0, xmax)
            scale = jnp.clip(xmax - xmin, min=1e-5) / self.maxq
            zero = jnp.round(-xmin / scale)
        if not self.perchannel:
            scale = jnp.tile(scale, shape[0])
            zero = jnp.tile(zero, shape[0])
        bshape = (-1,) + (1,) * (len(shape) - 1)
        self.scale = scale.reshape(bshape)
        self.zero = zero.reshape(bshape)
        self._params_found = True

    def ready(self):
        # Python flag instead of bool(jnp.all(scale != 0)): the latter forces a
        # device->host sync / pipeline stall on every quantize() call.
        return self._params_found

    def quantize(self, x):
        if self.enable and self.ready() and (self.bits < 16):
            shape = x.shape
            # Flatten trailing dims (metadata-only reshape); scale/zero broadcast per row.
            x2d = x.reshape(shape[0], -1)
            scale = self.scale.reshape(shape[0], 1).astype(jnp.float32)
            zero = self.zero.reshape(shape[0], 1).astype(jnp.float32)
            y = quant_dequant_pallas(x2d, scale, zero, self.maxq, self.sym)
            return y.reshape(shape)
        return x

    def __call__(self, x):   # forward
        return self.quantize(x)


# ------------------------------ reference -----------------------------------

def _ref_quant_dequant(x, scale, zero, maxq, sym):
    """Torch-style reference (divides by scale, as in the PyTorch spec)."""
    x = x.astype(jnp.float32)
    if sym:
        q = jnp.clip(jnp.round(x / scale), -(maxq + 1), maxq)
        return scale * q
    q = jnp.clip(jnp.round(x / scale) + zero, 0, maxq)
    return scale * (q - zero)


def _check(y, x, scale, zero, maxq, sym, name):
    ref = _ref_quant_dequant(x, scale, zero, maxq, sym)
    ref = ref.astype(y.dtype).astype(jnp.float32)
    err = jnp.abs(y.astype(jnp.float32) - ref)
    # The kernel multiplies by a per-row reciprocal; vs. the divide-based
    # reference this can flip round() only at exact half-step ties, where the
    # error equals one quantization step (== scale). Everything else must
    # match exactly; allow at most a handful of such ties.
    n_ties = int(jnp.sum(err > 1e-5))
    within_one_step = bool(jnp.all(err <= jnp.abs(scale) * 1.1 + 1e-4))
    assert within_one_step and n_ties <= 5, (name, float(jnp.max(err)), n_ties)


if __name__ == "__main__":
    key = jax.random.PRNGKey(0)
    k1, k2, k3 = jax.random.split(key, 3)

    # 1) symmetric, per-channel, 4-bit, f32 weight (single block)
    out_f, in_f = 32, 128
    x1 = jax.random.normal(k1, (out_f, in_f), dtype=jnp.float32)
    wq = WeightQuantizer(shape=out_f)
    wq.configure(bits=4, perchannel=True, sym=True)
    wq.find_params(x1)
    y1 = jax.block_until_ready(wq(x1))
    _check(y1, x1, wq.scale, wq.zero, wq.maxq, True, "sym-f32")

    # 2) asymmetric, per-channel, 4-bit, bf16 weight (native-dtype HBM traffic)
    x2 = jax.random.normal(k2, (out_f, in_f), dtype=jnp.float32).astype(jnp.bfloat16)
    wq2 = WeightQuantizer(shape=out_f)
    wq2.configure(bits=4, perchannel=True, sym=False)
    wq2.find_params(x2)
    y2 = jax.block_until_ready(wq2(x2))
    assert y2.dtype == jnp.bfloat16
    _check(y2, x2, wq2.scale, wq2.zero, wq2.maxq, False, "asym-bf16")

    # 3) multi-block grid with ragged edges (forces small tiles to exercise tiling)
    M3, N3 = 72, 300
    x3 = jax.random.normal(k3, (M3, N3), dtype=jnp.float32)
    wq3 = WeightQuantizer(shape=M3)
    wq3.configure(bits=8, perchannel=True, sym=True)
    wq3.find_params(x3)
    s3 = wq3.scale.reshape(M3, 1).astype(jnp.float32)
    z3 = wq3.zero.reshape(M3, 1).astype(jnp.float32)
    y3 = jax.block_until_ready(
        quant_dequant_pallas(x3, s3, z3, wq3.maxq, True, tm=16, tn=128))
    _check(y3, x3, s3, z3, wq3.maxq, True, "sym-ragged")

    print("KERNEL_OK")
</pallas_src>

<mosaic_0001>
module attributes {stable_mosaic.version = 11 : i64} {
  func.func @_qdq_sym_kernel(%arg0: i32, %arg1: i32, %arg2: memref<32x128xf32, #tpu.memory_space<vmem>>, %arg3: memref<32x1xf32, #tpu.memory_space<vmem>>, %arg4: memref<32x128xf32, #tpu.memory_space<vmem>>) attributes {dimension_semantics = [#tpu.dimension_semantics<parallel>, #tpu.dimension_semantics<parallel>], iteration_bounds = array<i64: 1, 1>, scalar_prefetch = 0 : i64, scratch_operands = 0 : i64, tpu.core_type = #tpu.core_type<tc>, window_params = [{transform_indices = @transform_0, window_bounds = array<i64: 32, 128>}, {transform_indices = @transform_1, window_bounds = array<i64: 32, 1>}, {transform_indices = @transform_2, window_bounds = array<i64: 32, 128>}]} {
    %c0 = arith.constant 0 : index
    %c0_0 = arith.constant 0 : index
    %0 = vector.load %arg3[%c0, %c0_0] : memref<32x1xf32, #tpu.memory_space<vmem>>, vector<32x1xf32>
    %cst = arith.constant 1.000000e+00 : f32
    %1 = vector.broadcast %cst : f32 to vector<32x1xf32>
    %2 = arith.divf %1, %0 : vector<32x1xf32>
    %c0_1 = arith.constant 0 : index
    %c0_2 = arith.constant 0 : index
    %3 = vector.load %arg2[%c0_1, %c0_2] : memref<32x128xf32, #tpu.memory_space<vmem>>, vector<32x128xf32>
    %4 = vector.broadcast %2 : vector<32x1xf32> to vector<32x128xf32>
    %5 = arith.mulf %3, %4 : vector<32x128xf32>
    %6 = math.roundeven %5 : vector<32x128xf32>
    %cst_3 = arith.constant -8.000000e+00 : f32
    %cst_4 = arith.constant 7.000000e+00 : f32
    %7 = vector.broadcast %cst_3 : f32 to vector<32x128xf32>
    %8 = arith.maximumf %7, %6 : vector<32x128xf32>
    %9 = vector.broadcast %cst_4 : f32 to vector<32x128xf32>
    %10 = arith.minimumf %9, %8 : vector<32x128xf32>
    %11 = vector.broadcast %0 : vector<32x1xf32> to vector<32x128xf32>
    %12 = arith.mulf %11, %10 : vector<32x128xf32>
    %c0_5 = arith.constant 0 : index
    %c0_6 = arith.constant 0 : index
    %13 = vector.load %arg4[%c0_5, %c0_6] : memref<32x128xf32, #tpu.memory_space<vmem>>, vector<32x128xf32>
    tpu.vector_store %arg4[%c0_5, %c0_6], %12 {strides = array<i32>} : memref<32x128xf32, #tpu.memory_space<vmem>>, vector<32x128xf32>,
    return
  }
  func.func @transform_0(%arg0: i32, %arg1: i32) -> (i32, i32) {
    %c0_i32 = arith.constant 0 : i32
    return %arg0, %arg1 : i32, i32
  }
  func.func @transform_1(%arg0: i32, %arg1: i32) -> (i32, i32) {
    %c0_i32 = arith.constant 0 : i32
    %c0_i32_0 = arith.constant 0 : i32
    return %arg0, %c0_i32 : i32, i32
  }
  func.func @transform_2(%arg0: i32, %arg1: i32) -> (i32, i32) {
    %c0_i32 = arith.constant 0 : i32
    return %arg0, %arg1 : i32, i32
  }
}

</mosaic_0001>

<llo_original>
// kernel: tpu_custom_call.1
$region0: #{tpu_custom_call.1}
  #allocation0 [shape = 'u32[]', space=smem, size = 0x4, offset = 0x4, fixed_abs, tag = 'smem constant byte address 0x4 - core index']
  #allocation1 [shape = 'u32[144,128]{1,0:T(1,128)}', space=vmem, size = 0x12000, scoped, tag = 'internal scratch']
  %s0 = inlined_call_operand.vmem [shape: f32[32,128], index: 0, kind: input, shape index: {}]
  %s1 = inlined_call_operand.vmem [shape: f32[32,1], index: 1, kind: input, shape index: {}]
  %s2 = inlined_call_operand.hbm [shape: f32[32,128], index: 2, kind: output, shape index: {}]
  %s3 = sld [smem:[#allocation0]]
  $region18: #{tpu_custom_call.1} parent=0
    _
  %s5 = ssub.s32 1, %s3
  %s6 = scalar_select 0, %s5, %s3
  $region1: #{tpu_custom_call.1} parent=0
    #allocation2 [shape = 'u8[16384]{0}', space=vmem, size = 0x4000, scoped, tag = 'output window, operand 0, single buffered']
    #allocation3 [shape = 's32[1]{0}', space=sflag, size = 0x4, scoped, tag = 'scoped memory for tpu_custom_call.1']
    %7 = vsyncpa [#allocation3], 0
    // Predicated region
    $region2: #{tpu_custom_call.1} parent=1 // pred_check
      _
    $region3: #{tpu_custom_call.1} parent=1 // pred_check_branch
      %9 = sbr.rel (0) target = $region5
    $region4: #{tpu_custom_call.1} parent=1 // pred_region
      _
    $region5: #{tpu_custom_call.1} parent=1 // pred_fallthru
      _
    // Predicated region
    $region6: #{tpu_custom_call.1} parent=1 // pred_check
      _
    $region7: #{tpu_custom_call.1} parent=1 // pred_check_branch
      %11 = sbr.rel (0) target = $region9
    $region8: #{tpu_custom_call.1} parent=1 // pred_region
      _
    $region9: #{tpu_custom_call.1} parent=1 // pred_fallthru
      _
    %v12 = vld [vmem:[%s1] sm:$0xff]
    %v13 = vld [vmem:[%s1 + $0x8] sm:$0xff]
    %v14 = vld [vmem:[%s1 + $0x10] sm:$0xff]
    %v15 = vld [vmem:[%s1 + $0x18] sm:$0xff]
    %v16 = vrcp.pop %v12
    %v17 = vmul.f32 1.0, %v16
    %v18 = vrcp.pop %v13
    %v19 = vmul.f32 1.0, %v18
    %v20 = vrcp.pop %v14
    %v21 = vmul.f32 1.0, %v20
    %v22 = vrcp.pop %v15
    %v23 = vmul.f32 1.0, %v22
    %v24 = vld [vmem:[%s0] sm:$0xff]
    %v25 = vld [vmem:[%s0 + $0x8] sm:$0xff]
    %v26 = vld [vmem:[%s0 + $0x10] sm:$0xff]
    %v27 = vld [vmem:[%s0 + $0x18] sm:$0xff]
    %29 = vset.pattern.permute.xlu0 0
    %30 = vperm.xlu0 %29, %v17
    %v31 = vpop.permute.xlu0 %30
    %34 = vset.pattern.permute.xlu0 0
    %35 = vperm.xlu0 %34, %v19
    %v36 = vpop.permute.xlu0 %35
    %39 = vset.pattern.permute.xlu0 0
    %40 = vperm.xlu0 %39, %v21
    %v41 = vpop.permute.xlu0 %40
    %44 = vset.pattern.permute.xlu0 0
    %45 = vperm.xlu0 %44, %v23
    %v46 = vpop.permute.xlu0 %45
    %v48 = vmul.f32 %v24, %v31
    %v49 = vmul.f32 %v25, %v36
    %v50 = vmul.f32 %v26, %v41
    %v51 = vmul.f32 %v27, %v46
    %v52 = vround.ne.pseudo %v48
    %v53 = vround.ne.pseudo %v49
    %v54 = vround.ne.pseudo %v50
    %v55 = vround.ne.pseudo %v51
    %v56 = vmax.f32 %v52, -8.0
    %v57 = vmax.f32 %v53, -8.0
    %v58 = vmax.f32 %v54, -8.0
    %v59 = vmax.f32 %v55, -8.0
    %v60 = vmin.f32 %v56, 7.0
    %v61 = vmin.f32 %v57, 7.0
    %v62 = vmin.f32 %v58, 7.0
    %v63 = vmin.f32 %v59, 7.0
    %65 = vset.pattern.permute.xlu0 0
    %66 = vperm.xlu0 %65, %v12
    %v67 = vpop.permute.xlu0 %66
    %70 = vset.pattern.permute.xlu0 0
    %71 = vperm.xlu0 %70, %v13
    %v72 = vpop.permute.xlu0 %71
    %75 = vset.pattern.permute.xlu0 0
    %76 = vperm.xlu0 %75, %v14
    %v77 = vpop.permute.xlu0 %76
    %80 = vset.pattern.permute.xlu0 0
    %81 = vperm.xlu0 %80, %v15
    %v82 = vpop.permute.xlu0 %81
    %v84 = vmul.f32 %v67, %v60
    %v85 = vmul.f32 %v72, %v61
    %v86 = vmul.f32 %v77, %v62
    %v87 = vmul.f32 %v82, %v63
    %88 = vst [vmem:[#allocation2] sm:$0xff] %v84
    %89 = vst [vmem:[#allocation2 + $0x8] sm:$0xff] %v85
    %90 = vst [vmem:[#allocation2 + $0x10] sm:$0xff] %v86
    %91 = vst [vmem:[#allocation2 + $0x18] sm:$0xff] %v87
    // Predicated region
    $region10: #{tpu_custom_call.1} parent=1 // pred_check
      _
    $region11: #{tpu_custom_call.1} parent=1 // pred_check_branch
      %93 = sbr.rel (0) target = $region13
    $region12: #{tpu_custom_call.1} parent=1 // pred_region
      %s95 = ssub.s32 512, 512
      %96 = vsyncadd [#allocation3], %s95
      %s97 = sshll.u32 [#allocation2], 4
      %s98 = int_to_ptr.vmem [resolvable:$true] %s97
      %103 = dma.vmem_to_hbm [thread:$0]  %s98, 512, %s2, [#allocation3], 128, 128, 8
    $region13: #{tpu_custom_call.1} parent=1 // pred_fallthru
      _
    // Predicated region
    $region14: #{tpu_custom_call.1} parent=1 // pred_check
      _
    $region15: #{tpu_custom_call.1} parent=1 // pred_check_branch
      %105 = sbr.rel (0) target = $region17
    $region16: #{tpu_custom_call.1} parent=1 // pred_region
      %106 = dma.done [#allocation3], 512
    $region17: #{tpu_custom_call.1} parent=1 // pred_fallthru
      _
    %107 = vsyncpa [#allocation3], 1

</llo_original>
